<compile_context>
chip_gen: v6e
topology: v6e:2x2x1
jax: 0.10.0
libtpu: 0.0.40
codegen_flags: <defaults>
</compile_context>

<pallas_src>
import math
from functools import partial

import jax
import jax.numpy as jnp
from jax import lax
from jax.experimental import pallas as pl
from jax.experimental.pallas import tpu as pltpu

LANES = 128
SUBLANES = 8
TM_TARGET = 2048                       # rows per block: 2048*128*4B = 1 MiB f32 tile
VMEM_LIMIT_BYTES = 32 * 1024 * 1024    # 2 inputs x 2 bufs x 1 MiB << 32 MiB (v7x-safe)


def _bce_focal_partial_kernel(x_ref, t_ref, out_ref, *,
                              gamma, alpha, n, tm, mask_from, nblocks):
    i = pl.program_id(0)

    x = x_ref[...].astype(jnp.float32)
    t = t_ref[...].astype(jnp.float32)

    pt = jax.nn.sigmoid(x)
    # Mirrors the PyTorch expression exactly (log(pt)/log(1-pt), not logsigmoid);
    # with an integer gamma the powers lower to VPU multiplies (integer_pow).
    loss = (-(1.0 - pt) ** gamma * t * jnp.log(pt)
            - pt ** gamma * (1.0 - t) * jnp.log(1.0 - pt))
    if alpha:  # matches PyTorch truthiness: None or 0 -> no scaling
        loss = loss * jnp.float32(alpha)

    def _partial(v):
        # (tm,128) -> (tm//8, 8, 128) splits at vreg boundaries (free); the axis-0
        # sum is pure VPU adds, so there is no per-step cross-lane reduction.
        return v.reshape(tm // SUBLANES, SUBLANES, LANES).sum(axis=0)

    if mask_from >= nblocks:
        # The grid covers exactly n elements: no padding anywhere, no mask needed.
        out_ref[...] = _partial(loss)
    else:
        @pl.when(i < mask_from)
        def _():
            out_ref[...] = _partial(loss)

        @pl.when(i >= mask_from)  # only the final block can contain padding
        def _():
            row = lax.broadcasted_iota(jnp.int32, (tm, LANES), 0)
            lane = lax.broadcasted_iota(jnp.int32, (tm, LANES), 1)
            # int32 flat index: fine for element counts < 2**31.
            flat = (i * tm + row) * LANES + lane
            out_ref[...] = _partial(jnp.where(flat < n, loss, 0.0))


def _sublane_granule(dtype):
    # native sublane tiling: 8 rows for 4-byte dtypes, 16 for 2-byte dtypes
    return max(SUBLANES, 32 // jnp.dtype(dtype).itemsize)


def _canon(a):
    a = jnp.asarray(a)
    if a.dtype in (jnp.float32, jnp.bfloat16, jnp.float16):
        return a
    return a.astype(jnp.float32)


def _as_rows(a, rows_pad):
    """View a flat array as a lane-dense (rows_pad, 128) slab.

    Free reshape when the size already matches; only ragged inputs pay for a
    zero-pad of the tail. Padded elements are masked in-kernel, so the zero
    fill can never produce 0 * (-inf) = NaN."""
    flat = a.reshape(-1)
    total = rows_pad * LANES
    if flat.shape[0] != total:
        flat = jnp.pad(flat, (0, total - flat.shape[0]))
    return flat.reshape(rows_pad, LANES)


def bce_focal_loss(_input, target, gamma=2, alpha=None,
                   reduction='elementwise_mean'):
    if reduction not in ('elementwise_mean', 'sum'):
        # TODO(synk): reduction=None (elementwise output) path not implemented.
        raise NotImplementedError("only 'elementwise_mean' and 'sum' supported")

    n = int(math.prod(_input.shape))
    assert int(math.prod(target.shape)) == n

    x = _canon(_input)
    t = _canon(target)

    granule = max(_sublane_granule(x.dtype), _sublane_granule(t.dtype))
    rows = pl.cdiv(n, LANES)
    rows_pad = ((rows + granule - 1) // granule) * granule
    tm = min(TM_TARGET, rows_pad)            # both are multiples of `granule`
    nblocks = pl.cdiv(rows_pad, tm)

    x2 = _as_rows(x, rows_pad)
    t2 = _as_rows(t, rows_pad)

    # First block whose element range extends past n (== nblocks if none does);
    # at most the final block ever needs masking.
    mask_from = n // (tm * LANES)

    kernel = partial(_bce_focal_partial_kernel,
                     gamma=gamma, alpha=alpha, n=n, tm=tm,
                     mask_from=mask_from, nblocks=nblocks)

    tile_spec = pl.BlockSpec((tm, LANES), lambda i: (i, 0))

    partials = pl.pallas_call(
        kernel,
        out_shape=jax.ShapeDtypeStruct((nblocks * SUBLANES, LANES), jnp.float32),
        grid_spec=pltpu.PrefetchScalarGridSpec(
            num_scalar_prefetch=0,
            grid=(nblocks,),
            in_specs=[tile_spec, tile_spec],
            out_specs=pl.BlockSpec((SUBLANES, LANES), lambda i: (i, 0)),
        ),
        compiler_params=pltpu.CompilerParams(
            dimension_semantics=("parallel",),      # megacore-shardable on v7x
            vmem_limit_bytes=VMEM_LIMIT_BYTES),
    )(x2, t2)

    # Single tiny epilogue reduce of the per-block (8,128) partials.
    total = jnp.sum(partials, dtype=jnp.float32)
    if reduction == 'elementwise_mean':
        total = total / jnp.float32(n)
    return total


def _reference(_input, target, gamma=2, alpha=None,
               reduction='elementwise_mean'):
    x = jnp.asarray(_input).astype(jnp.float32)
    t = jnp.asarray(target).astype(jnp.float32)
    pt = jax.nn.sigmoid(x)
    loss = (-(1.0 - pt) ** gamma * t * jnp.log(pt)
            - pt ** gamma * (1.0 - t) * jnp.log(1.0 - pt))
    if alpha:
        loss = loss * alpha
    if reduction == 'elementwise_mean':
        return jnp.mean(loss)
    return jnp.sum(loss)


if __name__ == "__main__":
    key = jax.random.PRNGKey(0)
    k1, k2, k3, k4 = jax.random.split(key, 4)

    # 1) main case: NCHW logits / binary targets (clean reshape path, single block)
    x = jax.random.normal(k1, (2, 4, 16, 16), dtype=jnp.float32)
    target = jax.random.bernoulli(k2, 0.3, (2, 4, 16, 16)).astype(jnp.float32)

    out_mean = jax.block_until_ready(bce_focal_loss(x, target))
    out_sum = jax.block_until_ready(bce_focal_loss(x, target, reduction='sum'))
    assert jnp.allclose(out_mean, _reference(x, target), rtol=1e-5, atol=1e-5)
    assert jnp.allclose(out_sum, _reference(x, target, reduction='sum'),
                        rtol=1e-5, atol=1e-3)

    # 2) ragged size (not a multiple of 128) + alpha: exercises tail pad + in-kernel mask
    xr = jax.random.normal(k3, (3, 5, 7), dtype=jnp.float32)
    tr = jax.random.bernoulli(k4, 0.5, (3, 5, 7)).astype(jnp.float32)
    out_r = jax.block_until_ready(bce_focal_loss(xr, tr, alpha=0.25))
    assert jnp.allclose(out_r, _reference(xr, tr, alpha=0.25), rtol=1e-5, atol=1e-5)

    # 3) bf16 inputs streamed as bf16, upcast in-kernel
    xb = x.astype(jnp.bfloat16)
    tb = target.astype(jnp.bfloat16)
    out_b = jax.block_until_ready(bce_focal_loss(xb, tb))
    assert jnp.allclose(out_b, _reference(xb, tb), rtol=1e-5, atol=1e-5)

    # 4) multi-block grid with a partial (masked) last block
    xm = jax.random.normal(k1, (8, 8, 64, 96), dtype=jnp.float32)
    tm_ = jax.random.bernoulli(k2, 0.3, (8, 8, 64, 96)).astype(jnp.float32)
    out_m = jax.block_until_ready(bce_focal_loss(xm, tm_, reduction='sum'))
    assert jnp.allclose(out_m, _reference(xm, tm_, reduction='sum'),
                        rtol=2e-5, atol=1e-1)

    print("KERNEL_OK")
</pallas_src>

<mosaic_0001>
module attributes {stable_mosaic.version = 11 : i64} {
  func.func @_bce_focal_partial_kernel(%arg0: i32, %arg1: memref<16x128xf32, #tpu.memory_space<vmem>>, %arg2: memref<16x128xf32, #tpu.memory_space<vmem>>, %arg3: memref<8x128xf32, #tpu.memory_space<vmem>>) attributes {dimension_semantics = [#tpu.dimension_semantics<parallel>], iteration_bounds = array<i64: 1>, scalar_prefetch = 0 : i64, scratch_operands = 0 : i64, tpu.core_type = #tpu.core_type<tc>, window_params = [{transform_indices = @transform_0, window_bounds = array<i64: 16, 128>}, {transform_indices = @transform_1, window_bounds = array<i64: 16, 128>}, {transform_indices = @transform_2, window_bounds = array<i64: 8, 128>}]} {
    %c0 = arith.constant 0 : index
    %c0_0 = arith.constant 0 : index
    %0 = vector.load %arg1[%c0, %c0_0] : memref<16x128xf32, #tpu.memory_space<vmem>>, vector<16x128xf32>
    %c0_1 = arith.constant 0 : index
    %c0_2 = arith.constant 0 : index
    %1 = vector.load %arg2[%c0_1, %c0_2] : memref<16x128xf32, #tpu.memory_space<vmem>>, vector<16x128xf32>
    %2 = arith.negf %0 : vector<16x128xf32>
    %3 = math.exp %2 : vector<16x128xf32>
    %cst = arith.constant 1.000000e+00 : f32
    %4 = vector.broadcast %cst : f32 to vector<16x128xf32>
    %5 = arith.addf %4, %3 : vector<16x128xf32>
    %6 = arith.divf %4, %5 : vector<16x128xf32>
    %cst_3 = arith.constant 1.000000e+00 : f32
    %7 = vector.broadcast %cst_3 : f32 to vector<16x128xf32>
    %8 = arith.subf %7, %6 : vector<16x128xf32>
    %9 = arith.mulf %8, %8 : vector<16x128xf32>
    %cst_4 = arith.constant 0.000000e+00 : f32
    %10 = vector.broadcast %cst_4 : f32 to vector<16x128xf32>
    %11 = arith.subf %10, %9 : vector<16x128xf32>
    %12 = arith.mulf %11, %1 : vector<16x128xf32>
    %13 = math.log %6 : vector<16x128xf32>
    %14 = arith.mulf %12, %13 : vector<16x128xf32>
    %15 = arith.mulf %6, %6 : vector<16x128xf32>
    %cst_5 = arith.constant 1.000000e+00 : f32
    %16 = vector.broadcast %cst_5 : f32 to vector<16x128xf32>
    %17 = arith.subf %16, %1 : vector<16x128xf32>
    %18 = arith.mulf %15, %17 : vector<16x128xf32>
    %cst_6 = arith.constant 1.000000e+00 : f32
    %19 = vector.broadcast %cst_6 : f32 to vector<16x128xf32>
    %20 = arith.subf %19, %6 : vector<16x128xf32>
    %21 = math.log %20 : vector<16x128xf32>
    %22 = arith.mulf %18, %21 : vector<16x128xf32>
    %23 = arith.subf %14, %22 : vector<16x128xf32>
    %24 = vector.shape_cast %23 : vector<16x128xf32> to vector<2x8x128xf32>
    %cst_7 = arith.constant dense<0.000000e+00> : vector<8x128xf32>
    %25 = vector.multi_reduction <add>, %24, %cst_7 [0] : vector<2x8x128xf32> to vector<8x128xf32>
    %c0_8 = arith.constant 0 : index
    %c0_9 = arith.constant 0 : index
    %26 = vector.load %arg3[%c0_8, %c0_9] : memref<8x128xf32, #tpu.memory_space<vmem>>, vector<8x128xf32>
    tpu.vector_store %arg3[%c0_8, %c0_9], %25 {strides = array<i32>} : memref<8x128xf32, #tpu.memory_space<vmem>>, vector<8x128xf32>,
    return
  }
  func.func @transform_0(%arg0: i32) -> (i32, i32) {
    %c0_i32 = arith.constant 0 : i32
    %c0_i32_0 = arith.constant 0 : i32
    return %arg0, %c0_i32 : i32, i32
  }
  func.func @transform_1(%arg0: i32) -> (i32, i32) {
    %c0_i32 = arith.constant 0 : i32
    %c0_i32_0 = arith.constant 0 : i32
    return %arg0, %c0_i32 : i32, i32
  }
  func.func @transform_2(%arg0: i32) -> (i32, i32) {
    %c0_i32 = arith.constant 0 : i32
    %c0_i32_0 = arith.constant 0 : i32
    return %arg0, %c0_i32 : i32, i32
  }
}

</mosaic_0001>

<llo_original>
// kernel: tpu_custom_call.1
$region0: #{tpu_custom_call.1}
  #allocation0 [shape = 'u32[]', space=smem, size = 0x4, offset = 0x4, fixed_abs, tag = 'smem constant byte address 0x4 - core index']
  #allocation1 [shape = 'u32[144,128]{1,0:T(1,128)}', space=vmem, size = 0x12000, scoped, tag = 'internal scratch']
  %s0 = inlined_call_operand.hbm [shape: f32[16,128], index: 0, kind: input, shape index: {}]
  %s1 = inlined_call_operand.hbm [shape: f32[16,128], index: 1, kind: input, shape index: {}]
  %s2 = inlined_call_operand.hbm [shape: f32[8,128], index: 2, kind: output, shape index: {}]
  %s3 = sld [smem:[#allocation0]]
  $region26: #{tpu_custom_call.1} parent=0
    _
  %s5 = ssub.s32 1, %s3
  %s6 = scalar_select 0, %s5, %s3
  $region1: #{tpu_custom_call.1} parent=0
    #allocation2 [shape = 'u8[8192]{0}', space=vmem, size = 0x2000, scoped, tag = 'input window, operand 0, single buffered']
    #allocation3 [shape = 's32[1]{0}', space=sflag, size = 0x4, scoped, tag = 'scoped memory for tpu_custom_call.1']
    #allocation4 [shape = 's32[1]{0}', space=sflag, size = 0x4, scoped, tag = 'scoped memory for tpu_custom_call.1']
    #allocation5 [shape = 'u8[8192]{0}', space=vmem, size = 0x2000, scoped, tag = 'input window, operand 1, single buffered']
    #allocation6 [shape = 's32[1]{0}', space=sflag, size = 0x4, scoped, tag = 'scoped memory for tpu_custom_call.1']
    #allocation7 [shape = 'u8[4096]{0}', space=vmem, size = 0x1000, scoped, tag = 'output window, operand 0, single buffered']
    %7 = vsyncpa [#allocation3], 0
    %8 = vsyncpa [#allocation6], 0
    %9 = vsyncpa [#allocation4], 0
    // Predicated region
    $region2: #{tpu_custom_call.1} parent=1 // pred_check
      _
    $region3: #{tpu_custom_call.1} parent=1 // pred_check_branch
      %11 = sbr.rel (0) target = $region5
    $region4: #{tpu_custom_call.1} parent=1 // pred_region
      %s13 = ssub.s32 256, 256
      %14 = vsyncadd [#allocation3], %s13
      %s15 = sshll.u32 [#allocation2], 4
      %s16 = int_to_ptr.vmem [resolvable:$true] %s15
      %21 = dma.hbm_to_vmem [thread:$0]  %s0, 256, %s16, [#allocation3], 128, 128, 8
    $region5: #{tpu_custom_call.1} parent=1 // pred_fallthru
      _
    // Predicated region
    $region6: #{tpu_custom_call.1} parent=1 // pred_check
      _
    $region7: #{tpu_custom_call.1} parent=1 // pred_check_branch
      %23 = sbr.rel (0) target = $region9
    $region8: #{tpu_custom_call.1} parent=1 // pred_region
      %s25 = ssub.s32 256, 256
      %26 = vsyncadd [#allocation6], %s25
      %s27 = sshll.u32 [#allocation5], 4
      %s28 = int_to_ptr.vmem [resolvable:$true] %s27
      %33 = dma.hbm_to_vmem [thread:$0]  %s1, 256, %s28, [#allocation6], 128, 128, 8
    $region9: #{tpu_custom_call.1} parent=1 // pred_fallthru
      _
    // Predicated region
    $region10: #{tpu_custom_call.1} parent=1 // pred_check
      _
    $region11: #{tpu_custom_call.1} parent=1 // pred_check_branch
      %35 = sbr.rel (0) target = $region13
    $region12: #{tpu_custom_call.1} parent=1 // pred_region
      %36 = dma.done [#allocation3], 256
    $region13: #{tpu_custom_call.1} parent=1 // pred_fallthru
      _
    // Predicated region
    $region14: #{tpu_custom_call.1} parent=1 // pred_check
      _
    $region15: #{tpu_custom_call.1} parent=1 // pred_check_branch
      %38 = sbr.rel (0) target = $region17
    $region16: #{tpu_custom_call.1} parent=1 // pred_region
      %39 = dma.done [#allocation6], 256
    $region17: #{tpu_custom_call.1} parent=1 // pred_fallthru
      _
    %v40 = vld [vmem:[#allocation2] sm:$0xff]
    %v41 = vld [vmem:[#allocation2 + $0x8] sm:$0xff]
    %v42 = vld [vmem:[#allocation5] sm:$0xff]
    %v43 = vld [vmem:[#allocation5 + $0x8] sm:$0xff]
    %v44 = vxor.u32 %v40, 2147483648
    %v45 = vxor.u32 %v41, 2147483648
    %v46 = vmul.f32 %v44, 1.442695
    %v47 = vpow.pop %v46
    %v48 = vmul.f32 %v45, 1.442695
    %v49 = vpow.pop %v48
    %v50 = vadd.f32 %v47, 1.0
    %v51 = vadd.f32 %v49, 1.0
    %v52 = vrcp.pop %v50
    %v53 = vmul.f32 1.0, %v52
    %v54 = vrcp.pop %v51
    %v55 = vmul.f32 1.0, %v54
    %v56 = vsub.f32 1.0, %v53
    %v57 = vsub.f32 1.0, %v55
    %v58 = vmul.f32 %v56, %v56
    %v59 = vmul.f32 %v57, %v57
    %v60 = vsub.f32 0.0, %v58
    %v61 = vsub.f32 0.0, %v59
    %v62 = vmul.f32 %v60, %v42
    %v63 = vmul.f32 %v61, %v43
    %v64 = vlog2.pop %v53
    %v65 = vmul.f32 %v64, 0.6931472
    %v66 = vlog2.pop %v55
    %v67 = vmul.f32 %v66, 0.6931472
    %v68 = vmul.f32 %v62, %v65
    %v69 = vmul.f32 %v63, %v67
    %v70 = vmul.f32 %v53, %v53
    %v71 = vmul.f32 %v55, %v55
    %v72 = vsub.f32 1.0, %v42
    %v73 = vsub.f32 1.0, %v43
    %v74 = vmul.f32 %v70, %v72
    %v75 = vmul.f32 %v71, %v73
    %v76 = vlog2.pop %v56
    %v77 = vmul.f32 %v76, 0.6931472
    %v78 = vlog2.pop %v57
    %v79 = vmul.f32 %v78, 0.6931472
    %v80 = vmul.f32 %v74, %v77
    %v81 = vmul.f32 %v75, %v79
    %v82 = vsub.f32 %v68, %v80
    %v83 = vsub.f32 %v69, %v81
    %v84 = vadd.f32 %v82, %v83
    %85 = vst [vmem:[#allocation7] sm:$0xff] %v84
    // Predicated region
    $region18: #{tpu_custom_call.1} parent=1 // pred_check
      _
    $region19: #{tpu_custom_call.1} parent=1 // pred_check_branch
      %87 = sbr.rel (0) target = $region21
    $region20: #{tpu_custom_call.1} parent=1 // pred_region
      %s89 = ssub.s32 128, 128
      %90 = vsyncadd [#allocation4], %s89
      %s92 = sshll.u32 [#allocation7], 4
      %s93 = int_to_ptr.vmem [resolvable:$true] %s92
      %95 = dma.vmem_to_hbm [thread:$0]  %s93, 128, %s2, [#allocation4]
    $region21: #{tpu_custom_call.1} parent=1 // pred_fallthru
      _
    // Predicated region
    $region22: #{tpu_custom_call.1} parent=1 // pred_check
      _
    $region23: #{tpu_custom_call.1} parent=1 // pred_check_branch
      %97 = sbr.rel (0) target = $region25
    $region24: #{tpu_custom_call.1} parent=1 // pred_region
      %98 = dma.done [#allocation4], 128
    $region25: #{tpu_custom_call.1} parent=1 // pred_fallthru
      _
    %99 = vsyncpa [#allocation3], 1
    %100 = vsyncpa [#allocation6], 1
    %101 = vsyncpa [#allocation4], 1

</llo_original>
